<compile_context>
chip_gen: v7x
topology: tpu7x:2x2x1
jax: 0.10.0
libtpu: 0.0.40
codegen_flags: <defaults>
</compile_context>

<pallas_src>
import jax
import jax.numpy as jnp
from jax.experimental import pallas as pl
from jax.experimental.pallas import tpu as pltpu


def valuenet_kernel(xt_ref, w1_ref, b1_ref, w2_ref, b2_ref, o_ref):
    """One batch tile (transposed dataflow): w2 . ReLU(w1 @ xT + b1) + b2.

    xt_ref: (S, TB)  VMEM, batch-tiled, lane-dense
    w1_ref: (H, S)   VMEM, resident across grid steps (PyTorch fc1.weight layout)
    b1_ref: (H, 1)   VMEM, resident (column; broadcasts along lanes)
    w2_ref: (1, H)   VMEM, resident (PyTorch fc2.weight layout)
    b2_ref: (1,)     SMEM scalar
    o_ref : (1, TB)  VMEM, lane-dense output row
    """
    # fc1 on the MXU with f32 accumulate; bias + ReLU on the VPU.
    h = jnp.dot(w1_ref[...], xt_ref[...], preferred_element_type=jnp.float32)
    h = jnp.maximum(h + b1_ref[...], 0.0)                       # (H, TB)

    # fc2 on the MXU: (1, H) @ (H, TB) -> lane-dense (1, TB), no relayout.
    v = jnp.dot(w2_ref[...], h, preferred_element_type=jnp.float32)
    o_ref[...] = (v + b2_ref[0]).astype(o_ref.dtype)            # (1, TB)


def value_net_forward(x, w1, b1, w2, b2):
    """ValueNet forward. x: (B, S) f32 -> (B, 1) f32.

    Parameter layouts (native PyTorch):
      w1: (H, S)  fc1.weight
      b1: (H,)    fc1.bias
      w2: (1, H)  fc2.weight
      b2: (1,)    fc2.bias
    """
    B, S = x.shape
    H = w1.shape[0]

    # Transposed dataflow: hand the kernel x as (S, B) so the batch axis sits
    # on lanes.  (In an RL loop, keep x stored as (S, B) to skip this op.)
    xt = x.T
    b1_col = b1.reshape(H, 1)

    # Tile selection: one big tile for small batches (zero grid-revisit
    # overhead); 1024-row tiles for large batches so v7x's two TensorCores
    # both get work via the "parallel" batch axis.  No padding: either the
    # block equals the full dim or the last block overhangs (masked writes).
    if B <= 1024:
        tb = B
    else:
        tb = 1024
    n_tiles = pl.cdiv(B, tb)

    weight_bytes = (H * S + H + H + 1) * 4
    cost = pl.CostEstimate(
        flops=2 * B * S * H + 2 * B * H,
        bytes_accessed=(B * S + B) * 4 + weight_bytes,
        transcendentals=0,
    )

    out = pl.pallas_call(
        valuenet_kernel,
        out_shape=jax.ShapeDtypeStruct((1, B), jnp.float32),
        grid=(n_tiles,),
        in_specs=[
            pl.BlockSpec((S, tb), lambda i: (0, i)),             # xT: batch-tiled
            pl.BlockSpec((H, S), lambda i: (0, 0)),              # w1: resident
            pl.BlockSpec((H, 1), lambda i: (0, 0)),              # b1: resident
            pl.BlockSpec((1, H), lambda i: (0, 0)),              # w2: resident
            pl.BlockSpec(memory_space=pltpu.MemorySpace.SMEM),   # b2: SMEM scalar
        ],
        out_specs=pl.BlockSpec((1, tb), lambda i: (0, i)),       # lane-dense row
        compiler_params=pltpu.CompilerParams(
            dimension_semantics=("parallel",),
        ),
        cost_estimate=cost,
    )(xt, w1, b1_col, w2, b2)

    # (1, B) lane-dense slab -> (B, 1) to match the PyTorch output shape.
    return out.reshape(B, 1)


def init_params(key, state_dim, hidden_dim):
    """Deterministic init mimicking torch.nn.Linear (U(-1/sqrt(fan_in), +)),
    in native PyTorch parameter layouts."""
    k1, k2, k3, k4 = jax.random.split(key, 4)
    bound1 = 1.0 / (state_dim ** 0.5)
    bound2 = 1.0 / (hidden_dim ** 0.5)
    w1 = jax.random.uniform(k1, (hidden_dim, state_dim), jnp.float32, -bound1, bound1)
    b1 = jax.random.uniform(k2, (hidden_dim,), jnp.float32, -bound1, bound1)
    w2 = jax.random.uniform(k3, (1, hidden_dim), jnp.float32, -bound2, bound2)
    b2 = jax.random.uniform(k4, (1,), jnp.float32, -bound2, bound2)
    return w1, b1, w2, b2


if __name__ == "__main__":
    # CartPole-v0: state_dim = 4; module hidden_dim = 128.  batch = 256 is a
    # "small B" case -> tb = 256, grid = (1,), weights DMA'd exactly once.
    state_dim, hidden_dim, batch = 4, 128, 256

    key = jax.random.PRNGKey(0)
    kx, kp = jax.random.split(key)
    x = jax.random.normal(kx, (batch, state_dim), jnp.float32)
    w1, b1, w2, b2 = init_params(kp, state_dim, hidden_dim)

    out = value_net_forward(x, w1, b1, w2, b2)
    jax.block_until_ready(out)

    # Pure-JAX reference (same math as the PyTorch forward).
    ref = jnp.maximum(x @ w1.T + b1, 0.0) @ w2.T + b2
    assert out.shape == (batch, 1)
    assert jnp.allclose(out, ref, atol=1e-5, rtol=1e-5)

    print("KERNEL_OK")
</pallas_src>

<mosaic_0001>
module attributes {stable_mosaic.version = 11 : i64} {
  func.func @valuenet_kernel(%arg0: i32, %arg1: memref<4x256xf32, #tpu.memory_space<vmem>>, %arg2: memref<128x4xf32, #tpu.memory_space<vmem>>, %arg3: memref<128x1xf32, #tpu.memory_space<vmem>>, %arg4: memref<1x128xf32, #tpu.memory_space<vmem>>, %arg5: memref<1xf32, #tpu.memory_space<smem>>, %arg6: memref<1x256xf32, #tpu.memory_space<vmem>>) attributes {dimension_semantics = [#tpu.dimension_semantics<parallel>], iteration_bounds = array<i64: 1>, scalar_prefetch = 0 : i64, scratch_operands = 0 : i64, tpu.core_type = #tpu.core_type<tc>, window_params = [{transform_indices = @transform_0, window_bounds = array<i64: 4, 256>}, {pipeline_mode = #tpu.pipeline_mode<synchronous>, transform_indices = @transform_1, window_bounds = array<i64: 128, 4>}, {pipeline_mode = #tpu.pipeline_mode<synchronous>, transform_indices = @transform_2, window_bounds = array<i64: 128, 1>}, {pipeline_mode = #tpu.pipeline_mode<synchronous>, transform_indices = @transform_3, window_bounds = array<i64: 1, 128>}, {transform_indices = @transform_4, window_bounds = array<i64: 1>}, {transform_indices = @transform_5, window_bounds = array<i64: 1, 256>}]} {
    %c0 = arith.constant 0 : index
    %c0_0 = arith.constant 0 : index
    %0 = vector.load %arg2[%c0, %c0_0] : memref<128x4xf32, #tpu.memory_space<vmem>>, vector<128x4xf32>
    %c0_1 = arith.constant 0 : index
    %c0_2 = arith.constant 0 : index
    %1 = vector.load %arg1[%c0_1, %c0_2] : memref<4x256xf32, #tpu.memory_space<vmem>>, vector<4x256xf32>
    %cst = arith.constant dense<0.000000e+00> : vector<128x256xf32>
    %2 = tpu.matmul %0, %1, %cst {dimension_numbers = #tpu.dot_dimension_numbers<[1], [0], [0], [1], [0, 0, 1, 1], [], []>} : vector<128x4xf32>, vector<4x256xf32>, vector<128x256xf32> -> vector<128x256xf32>
    %c0_3 = arith.constant 0 : index
    %c0_4 = arith.constant 0 : index
    %3 = vector.load %arg3[%c0_3, %c0_4] : memref<128x1xf32, #tpu.memory_space<vmem>>, vector<128x1xf32>
    %4 = vector.broadcast %3 : vector<128x1xf32> to vector<128x256xf32>
    %5 = arith.addf %2, %4 : vector<128x256xf32>
    %cst_5 = arith.constant 0.000000e+00 : f32
    %6 = vector.broadcast %cst_5 : f32 to vector<128x256xf32>
    %7 = arith.maximumf %5, %6 : vector<128x256xf32>
    %c0_6 = arith.constant 0 : index
    %c0_7 = arith.constant 0 : index
    %8 = vector.load %arg4[%c0_6, %c0_7] : memref<1x128xf32, #tpu.memory_space<vmem>>, vector<1x128xf32>
    %cst_8 = arith.constant dense<0.000000e+00> : vector<1x256xf32>
    %9 = tpu.matmul %8, %7, %cst_8 {dimension_numbers = #tpu.dot_dimension_numbers<[1], [0], [0], [1], [0, 0, 1, 1], [], []>} : vector<1x128xf32>, vector<128x256xf32>, vector<1x256xf32> -> vector<1x256xf32>
    %c0_9 = arith.constant 0 : index
    %10 = memref.load %arg5[%c0_9] : memref<1xf32, #tpu.memory_space<smem>>
    %11 = vector.broadcast %10 : f32 to vector<1x256xf32>
    %12 = arith.addf %9, %11 : vector<1x256xf32>
    %c0_10 = arith.constant 0 : index
    %c0_11 = arith.constant 0 : index
    %13 = vector.load %arg6[%c0_10, %c0_11] : memref<1x256xf32, #tpu.memory_space<vmem>>, vector<1x256xf32>
    tpu.vector_store %arg6[%c0_10, %c0_11], %12 {strides = array<i32>} : memref<1x256xf32, #tpu.memory_space<vmem>>, vector<1x256xf32>,
    return
  }
  func.func @transform_0(%arg0: i32) -> (i32, i32) {
    %c0_i32 = arith.constant 0 : i32
    %c0_i32_0 = arith.constant 0 : i32
    return %c0_i32, %arg0 : i32, i32
  }
  func.func @transform_1(%arg0: i32) -> (i32, i32) {
    %c0_i32 = arith.constant 0 : i32
    %c0_i32_0 = arith.constant 0 : i32
    %c0_i32_1 = arith.constant 0 : i32
    return %c0_i32, %c0_i32_0 : i32, i32
  }
  func.func @transform_2(%arg0: i32) -> (i32, i32) {
    %c0_i32 = arith.constant 0 : i32
    %c0_i32_0 = arith.constant 0 : i32
    %c0_i32_1 = arith.constant 0 : i32
    return %c0_i32, %c0_i32_0 : i32, i32
  }
  func.func @transform_3(%arg0: i32) -> (i32, i32) {
    %c0_i32 = arith.constant 0 : i32
    %c0_i32_0 = arith.constant 0 : i32
    %c0_i32_1 = arith.constant 0 : i32
    return %c0_i32, %c0_i32_0 : i32, i32
  }
  func.func @transform_4(%arg0: i32) -> i32 {
    %c0_i32 = arith.constant 0 : i32
    %c0_i32_0 = arith.constant 0 : i32
    return %c0_i32 : i32
  }
  func.func @transform_5(%arg0: i32) -> (i32, i32) {
    %c0_i32 = arith.constant 0 : i32
    %c0_i32_0 = arith.constant 0 : i32
    return %c0_i32, %arg0 : i32, i32
  }
}

</mosaic_0001>

<llo_original>
// kernel: tpu_custom_call.1
$region0: #{tpu_custom_call.1}
  #allocation0 [shape = 'u32[]', space=smem, size = 0x4, offset = 0x4, fixed_abs, tag = 'smem constant byte address 0x4 - core index']
  #allocation1 [shape = 'u32[144,128]{1,0:T(1,128)}', space=vmem, size = 0x12000, scoped, tag = 'internal scratch']
  #allocation2 [shape = 'f32[1]{0:T(128)S(6)}', space=smem, size = 0x200, scoped, tag = 'scoped memory for tpu_custom_call.1']
  %s0 = inlined_call_operand.vmem [shape: f32[4,256], index: 0, kind: input, shape index: {}]
  %s1 = inlined_call_operand.vmem [shape: f32[128,4], index: 1, kind: input, shape index: {}]
  %s2 = inlined_call_operand.vmem [shape: f32[128,1], index: 2, kind: input, shape index: {}]
  %s3 = inlined_call_operand.vmem [shape: f32[1,128], index: 3, kind: input, shape index: {}]
  %s4 = inlined_call_operand.<no memory space> [shape: f32[1], index: 4, kind: input, shape index: {}]
  %s5 = inlined_call_operand.hbm [shape: f32[1,256], index: 5, kind: output, shape index: {}]
  %s6 = sld [smem:[#allocation0]]
  $region30: #{tpu_custom_call.1} parent=0
    _
  %s8 = ssub.s32 1, %s6
  %s9 = scalar_select 0, %s8, %s6
  %10 = sst [smem:[#allocation2]] %s4
  $region1: #{tpu_custom_call.1} parent=0
    #allocation3 [shape = 'u8[1024]{0}', space=vmem, size = 0x400, scoped, tag = 'output window, operand 0, single buffered']
    #allocation4 [shape = 's32[1]{0}', space=sflag, size = 0x4, scoped, tag = 'scoped memory for tpu_custom_call.1']
    %11 = vsyncpa [#allocation4], 0
    // Predicated region
    $region2: #{tpu_custom_call.1} parent=1 // pred_check
      _
    $region3: #{tpu_custom_call.1} parent=1 // pred_check_branch
      %13 = sbr.rel (0) target = $region5
    $region4: #{tpu_custom_call.1} parent=1 // pred_region
      _
    $region5: #{tpu_custom_call.1} parent=1 // pred_fallthru
      _
    // Predicated region
    $region6: #{tpu_custom_call.1} parent=1 // pred_check
      _
    $region7: #{tpu_custom_call.1} parent=1 // pred_check_branch
      %15 = sbr.rel (0) target = $region9
    $region8: #{tpu_custom_call.1} parent=1 // pred_region
      _
    $region9: #{tpu_custom_call.1} parent=1 // pred_fallthru
      _
    // Predicated region
    $region10: #{tpu_custom_call.1} parent=1 // pred_check
      _
    $region11: #{tpu_custom_call.1} parent=1 // pred_check_branch
      %17 = sbr.rel (0) target = $region13
    $region12: #{tpu_custom_call.1} parent=1 // pred_region
      _
    $region13: #{tpu_custom_call.1} parent=1 // pred_fallthru
      _
    // Predicated region
    $region14: #{tpu_custom_call.1} parent=1 // pred_check
      _
    $region15: #{tpu_custom_call.1} parent=1 // pred_check_branch
      %19 = sbr.rel (0) target = $region17
    $region16: #{tpu_custom_call.1} parent=1 // pred_region
      _
    $region17: #{tpu_custom_call.1} parent=1 // pred_fallthru
      _
    // Predicated region
    $region18: #{tpu_custom_call.1} parent=1 // pred_check
      _
    $region19: #{tpu_custom_call.1} parent=1 // pred_check_branch
      %21 = sbr.rel (0) target = $region21
    $region20: #{tpu_custom_call.1} parent=1 // pred_region
      _
    $region21: #{tpu_custom_call.1} parent=1 // pred_fallthru
      _
    %v22 = vld [vmem:[%s1] sm:$0xff]
    %v23 = vld [vmem:[%s1 + $0x8] sm:$0xff]
    %v24 = vld [vmem:[%s1 + $0x10] sm:$0xff]
    %v25 = vld [vmem:[%s1 + $0x18] sm:$0xff]
    %v26 = vld [vmem:[%s1 + $0x20] sm:$0xff]
    %v27 = vld [vmem:[%s1 + $0x28] sm:$0xff]
    %v28 = vld [vmem:[%s1 + $0x30] sm:$0xff]
    %v29 = vld [vmem:[%s1 + $0x38] sm:$0xff]
    %v30 = vld [vmem:[%s1 + $0x40] sm:$0xff]
    %v31 = vld [vmem:[%s1 + $0x48] sm:$0xff]
    %v32 = vld [vmem:[%s1 + $0x50] sm:$0xff]
    %v33 = vld [vmem:[%s1 + $0x58] sm:$0xff]
    %v34 = vld [vmem:[%s1 + $0x60] sm:$0xff]
    %v35 = vld [vmem:[%s1 + $0x68] sm:$0xff]
    %v36 = vld [vmem:[%s1 + $0x70] sm:$0xff]
    %v37 = vld [vmem:[%s1 + $0x78] sm:$0xff]
    %v38 = vld [vmem:[%s0] sm:$0xff]
    %v39 = vld [vmem:[%s2] sm:$0xff]
    %v40 = vld [vmem:[%s2 + $0x8] sm:$0xff]
    %v41 = vld [vmem:[%s2 + $0x10] sm:$0xff]
    %v42 = vld [vmem:[%s2 + $0x18] sm:$0xff]
    %v43 = vld [vmem:[%s2 + $0x20] sm:$0xff]
    %v44 = vld [vmem:[%s2 + $0x28] sm:$0xff]
    %v45 = vld [vmem:[%s2 + $0x30] sm:$0xff]
    %v46 = vld [vmem:[%s2 + $0x38] sm:$0xff]
    %v47 = vld [vmem:[%s2 + $0x40] sm:$0xff]
    %v48 = vld [vmem:[%s2 + $0x48] sm:$0xff]
    %v49 = vld [vmem:[%s2 + $0x50] sm:$0xff]
    %v50 = vld [vmem:[%s2 + $0x58] sm:$0xff]
    %v51 = vld [vmem:[%s2 + $0x60] sm:$0xff]
    %v52 = vld [vmem:[%s2 + $0x68] sm:$0xff]
    %v53 = vld [vmem:[%s2 + $0x70] sm:$0xff]
    %v54 = vld [vmem:[%s2 + $0x78] sm:$0xff]
    %56 = vset.pattern.permute.xlu0 0
    %57 = vperm.xlu0 %56, %v39
    %v58 = vpop.permute.xlu0 %57
    %61 = vset.pattern.permute.xlu0 0
    %62 = vperm.xlu0 %61, %v40
    %v63 = vpop.permute.xlu0 %62
    %66 = vset.pattern.permute.xlu0 0
    %67 = vperm.xlu0 %66, %v41
    %v68 = vpop.permute.xlu0 %67
    %71 = vset.pattern.permute.xlu0 0
    %72 = vperm.xlu0 %71, %v42
    %v73 = vpop.permute.xlu0 %72
    %76 = vset.pattern.permute.xlu0 0
    %77 = vperm.xlu0 %76, %v43
    %v78 = vpop.permute.xlu0 %77
    %81 = vset.pattern.permute.xlu0 0
    %82 = vperm.xlu0 %81, %v44
    %v83 = vpop.permute.xlu0 %82
    %86 = vset.pattern.permute.xlu0 0
    %87 = vperm.xlu0 %86, %v45
    %v88 = vpop.permute.xlu0 %87
    %91 = vset.pattern.permute.xlu0 0
    %92 = vperm.xlu0 %91, %v46
    %v93 = vpop.permute.xlu0 %92
    %96 = vset.pattern.permute.xlu0 0
    %97 = vperm.xlu0 %96, %v47
    %v98 = vpop.permute.xlu0 %97
    %101 = vset.pattern.permute.xlu0 0
    %102 = vperm.xlu0 %101, %v48
    %v103 = vpop.permute.xlu0 %102
    %106 = vset.pattern.permute.xlu0 0
    %107 = vperm.xlu0 %106, %v49
    %v108 = vpop.permute.xlu0 %107
    %111 = vset.pattern.permute.xlu0 0
    %112 = vperm.xlu0 %111, %v50
    %v113 = vpop.permute.xlu0 %112
    %116 = vset.pattern.permute.xlu0 0
    %117 = vperm.xlu0 %116, %v51
    %v118 = vpop.permute.xlu0 %117
    %121 = vset.pattern.permute.xlu0 0
    %122 = vperm.xlu0 %121, %v52
    %v123 = vpop.permute.xlu0 %122
    %126 = vset.pattern.permute.xlu0 0
    %127 = vperm.xlu0 %126, %v53
    %v128 = vpop.permute.xlu0 %127
    %131 = vset.pattern.permute.xlu0 0
    %132 = vperm.xlu0 %131, %v54
    %v133 = vpop.permute.xlu0 %132
    %v136 = vcombine.high %v38, %v38
    %vm137 = vcmask 31744
    %v139 = vsel %vm137, %v22, 0
    %v142 = vsel %vm137, %v23, 0
    %v145 = vsel %vm137, %v24, 0
    %v148 = vsel %vm137, %v25, 0
    %v151 = vsel %vm137, %v26, 0
    %v154 = vsel %vm137, %v27, 0
    %v157 = vsel %vm137, %v28, 0
    %v160 = vsel %vm137, %v29, 0
    %v163 = vsel %vm137, %v30, 0
    %v166 = vsel %vm137, %v31, 0
    %v169 = vsel %vm137, %v32, 0
    %v172 = vsel %vm137, %v33, 0
    %v175 = vsel %vm137, %v34, 0
    %v178 = vsel %vm137, %v35, 0
    %v181 = vsel %vm137, %v36, 0
    %v184 = vsel %vm137, %v37, 0
    %vm186 = vcmask 1043456
    %v187 = vsel %vm186, %v38, 0
    %v189 = vsel %vm186, %v136, 0
    %191 = vmatprep.subr.mxu0 %v189
    %192 = vmatpush1.msra.mxu0 %v187
    %193 = vmatprep.subr.mxu0 0.0
    %194 = vmatpush1.msra.mxu0 0.0
    %195 = vmatprep.subr.mxu0 0.0
    %196 = vmatpush1.msra.mxu0 0.0
    %197 = vmatprep.subr.mxu0 0.0
    %198 = vmatpush1.msra.mxu0 0.0
    %199 = vmatprep.subr.mxu0 0.0
    %200 = vmatpush1.msra.mxu0 0.0
    %201 = vmatprep.subr.mxu0 0.0
    %202 = vmatpush1.msra.mxu0 0.0
    %203 = vmatprep.subr.mxu0 0.0
    %204 = vmatpush1.msra.mxu0 0.0
    %205 = vmatprep.subr.mxu0 0.0
    %206 = vmatpush1.msra.mxu0 0.0
    %207 = vmatprep.subr.mxu0 0.0
    %208 = vmatpush1.msra.mxu0 0.0
    %209 = vmatprep.subr.mxu0 0.0
    %210 = vmatpush1.msra.mxu0 0.0
    %211 = vmatprep.subr.mxu0 0.0
    %212 = vmatpush1.msra.mxu0 0.0
    %213 = vmatprep.subr.mxu0 0.0
    %214 = vmatpush1.msra.mxu0 0.0
    %215 = vmatprep.subr.mxu0 0.0
    %216 = vmatpush1.msra.mxu0 0.0
    %217 = vmatprep.subr.mxu0 0.0
    %218 = vmatpush1.msra.mxu0 0.0
    %219 = vmatprep.subr.mxu0 0.0
    %220 = vmatpush1.msra.mxu0 0.0
    %221 = vmatprep.subr.mxu0 0.0
    %222 = vmatpush1.msra.mxu0 0.0
    %223 = vmatprep.subr.mxu0 0.0
    %224 = vmatpush1.msra.mxu0 0.0
    %225 = vmatprep.subr.mxu0 0.0
    %226 = vmatpush1.msra.mxu0 0.0
    %227 = vmatprep.subr.mxu0 0.0
    %228 = vmatpush1.msra.mxu0 0.0
    %229 = vmatprep.subr.mxu0 0.0
    %230 = vmatpush1.msra.mxu0 0.0
    %231 = vmatprep.subr.mxu0 0.0
    %232 = vmatpush1.msra.mxu0 0.0
    %233 = vmatprep.subr.mxu0 0.0
    %234 = vmatpush1.msra.mxu0 0.0
    %235 = vmatprep.subr.mxu0 0.0
    %236 = vmatpush1.msra.mxu0 0.0
    %237 = vmatprep.subr.mxu0 0.0
    %238 = vmatpush1.msra.mxu0 0.0
    %239 = vmatprep.subr.mxu0 0.0
    %240 = vmatpush1.msra.mxu0 0.0
    %241 = vmatprep.subr.mxu0 0.0
    %242 = vmatpush1.msra.mxu0 0.0
    %243 = vmatprep.subr.mxu0 0.0
    %244 = vmatpush1.msra.mxu0 0.0
    %245 = vmatprep.subr.mxu0 0.0
    %246 = vmatpush1.msra.mxu0 0.0
    %247 = vmatprep.subr.mxu0 0.0
    %248 = vmatpush1.msra.mxu0 0.0
    %249 = vmatprep.subr.mxu0 0.0
    %250 = vmatpush1.msra.mxu0 0.0
    %251 = vmatprep.subr.mxu0 0.0
    %252 = vmatpush1.msra.mxu0 0.0
    %253 = vmatprep.subr.mxu0 0.0
    %254 = vmatpush1.msra.mxu0 0.0
    %255 = vmatprep.mubr.f32.mxu0 0.0
    %256 = vmatmul.mubr.f32.gmra.mrb[0].mxu0 %v139
    %v257 = vpop.f32.mrb[0].mxu0
    %v258 = vadd.f32 %v58, %v257
    %v259 = vpop.f32.mrb[0].mxu0
    %v260 = vadd.f32 %v58, %v259
    %261 = vmatprep.mubr.f32.mxu0 0.0
    %262 = vmatmul.mubr.f32.gmra.mrb[0].mxu0 %v142
    %v263 = vpop.f32.mrb[0].mxu0
    %v264 = vadd.f32 %v63, %v263
    %v265 = vpop.f32.mrb[0].mxu0
    %v266 = vadd.f32 %v63, %v265
    %267 = vmatprep.mubr.f32.mxu0 0.0
    %268 = vmatmul.mubr.f32.gmra.mrb[0].mxu0 %v145
    %v269 = vpop.f32.mrb[0].mxu0
    %v270 = vadd.f32 %v68, %v269
    %v271 = vpop.f32.mrb[0].mxu0
    %v272 = vadd.f32 %v68, %v271
    %273 = vmatprep.mubr.f32.mxu0 0.0
    %274 = vmatmul.mubr.f32.gmra.mrb[0].mxu0 %v148
    %v275 = vpop.f32.mrb[0].mxu0
    %v276 = vadd.f32 %v73, %v275
    %v277 = vpop.f32.mrb[0].mxu0
    %v278 = vadd.f32 %v73, %v277
    %279 = vmatprep.mubr.f32.mxu0 0.0
    %280 = vmatmul.mubr.f32.gmra.mrb[0].mxu0 %v151
    %v281 = vpop.f32.mrb[0].mxu0
    %v282 = vadd.f32 %v78, %v281
    %v283 = vpop.f32.mrb[0].mxu0
    %v284 = vadd.f32 %v78, %v283
    %285 = vmatprep.mubr.f32.mxu0 0.0
    %286 = vmatmul.mubr.f32.gmra.mrb[0].mxu0 %v154
    %v287 = vpop.f32.mrb[0].mxu0
    %v288 = vadd.f32 %v83, %v287
    %v289 = vpop.f32.mrb[0].mxu0
    %v290 = vadd.f32 %v83, %v289
    %291 = vmatprep.mubr.f32.mxu0 0.0
    %292 = vmatmul.mubr.f32.gmra.mrb[0].mxu0 %v157
    %v293 = vpop.f32.mrb[0].mxu0
    %v294 = vadd.f32 %v88, %v293
    %v295 = vpop.f32.mrb[0].mxu0
    %v296 = vadd.f32 %v88, %v295
    %297 = vmatprep.mubr.f32.mxu0 0.0
    %298 = vmatmul.mubr.f32.gmra.mrb[0].mxu0 %v160
    %v299 = vpop.f32.mrb[0].mxu0
    %v300 = vadd.f32 %v93, %v299
    %v301 = vpop.f32.mrb[0].mxu0
    %v302 = vadd.f32 %v93, %v301
    %303 = vmatprep.mubr.f32.mxu0 0.0
    %304 = vmatmul.mubr.f32.gmra.mrb[0].mxu0 %v163
    %v305 = vpop.f32.mrb[0].mxu0
    %v306 = vadd.f32 %v98, %v305
    %v307 = vpop.f32.mrb[0].mxu0
    %v308 = vadd.f32 %v98, %v307
    %309 = vmatprep.mubr.f32.mxu0 0.0
    %310 = vmatmul.mubr.f32.gmra.mrb[0].mxu0 %v166
    %v311 = vpop.f32.mrb[0].mxu0
    %v312 = vadd.f32 %v103, %v311
    %v313 = vpop.f32.mrb[0].mxu0
    %v314 = vadd.f32 %v103, %v313
    %315 = vmatprep.mubr.f32.mxu0 0.0
    %316 = vmatmul.mubr.f32.gmra.mrb[0].mxu0 %v169
    %v317 = vpop.f32.mrb[0].mxu0
    %v318 = vadd.f32 %v108, %v317
    %v319 = vpop.f32.mrb[0].mxu0
    %v320 = vadd.f32 %v108, %v319
    %321 = vmatprep.mubr.f32.mxu0 0.0
    %322 = vmatmul.mubr.f32.gmra.mrb[0].mxu0 %v172
    %v323 = vpop.f32.mrb[0].mxu0
    %v324 = vadd.f32 %v113, %v323
    %v325 = vpop.f32.mrb[0].mxu0
    %v326 = vadd.f32 %v113, %v325
    %327 = vmatprep.mubr.f32.mxu0 0.0
    %328 = vmatmul.mubr.f32.gmra.mrb[0].mxu0 %v175
    %v329 = vpop.f32.mrb[0].mxu0
    %v330 = vadd.f32 %v118, %v329
    %v331 = vpop.f32.mrb[0].mxu0
    %v332 = vadd.f32 %v118, %v331
    %333 = vmatprep.mubr.f32.mxu0 0.0
    %334 = vmatmul.mubr.f32.gmra.mrb[0].mxu0 %v178
    %v335 = vpop.f32.mrb[0].mxu0
    %v336 = vadd.f32 %v123, %v335
    %v337 = vpop.f32.mrb[0].mxu0
    %v338 = vadd.f32 %v123, %v337
    %339 = vmatprep.mubr.f32.mxu0 0.0
    %340 = vmatmul.mubr.f32.gmra.mrb[0].mxu0 %v181
    %v341 = vpop.f32.mrb[0].mxu0
    %v342 = vadd.f32 %v128, %v341
    %v343 = vpop.f32.mrb[0].mxu0
    %v344 = vadd.f32 %v128, %v343
    %345 = vmatprep.mubr.f32.mxu0 0.0
    %346 = vmatmul.mubr.f32.gmra.mrb[0].mxu0 %v184
    %v347 = vpop.f32.mrb[0].mxu0
    %v348 = vadd.f32 %v133, %v347
    %v349 = vpop.f32.mrb[0].mxu0
    %v350 = vadd.f32 %v133, %v349
    %351 = vdwg.mxu0
    %v352 = vmax.f32 %v258, 0.0
    %v353 = vmax.f32 %v260, 0.0
    %v354 = vmax.f32 %v264, 0.0
    %v355 = vmax.f32 %v266, 0.0
    %v356 = vmax.f32 %v270, 0.0
    %v357 = vmax.f32 %v272, 0.0
    %v358 = vmax.f32 %v276, 0.0
    %v359 = vmax.f32 %v278, 0.0
    %v360 = vmax.f32 %v282, 0.0
    %v361 = vmax.f32 %v284, 0.0
    %v362 = vmax.f32 %v288, 0.0
    %v363 = vmax.f32 %v290, 0.0
    %v364 = vmax.f32 %v294, 0.0
    %v365 = vmax.f32 %v296, 0.0
    %v366 = vmax.f32 %v300, 0.0
    %v367 = vmax.f32 %v302, 0.0
    %v368 = vmax.f32 %v306, 0.0
    %v369 = vmax.f32 %v308, 0.0
    %v370 = vmax.f32 %v312, 0.0
    %v371 = vmax.f32 %v314, 0.0
    %v372 = vmax.f32 %v318, 0.0
    %v373 = vmax.f32 %v320, 0.0
    %v374 = vmax.f32 %v324, 0.0
    %v375 = vmax.f32 %v326, 0.0
    %v376 = vmax.f32 %v330, 0.0
    %v377 = vmax.f32 %v332, 0.0
    %v378 = vmax.f32 %v336, 0.0
    %v379 = vmax.f32 %v338, 0.0
    %v380 = vmax.f32 %v342, 0.0
    %v381 = vmax.f32 %v344, 0.0
    %v382 = vmax.f32 %v348, 0.0
    %v383 = vmax.f32 %v350, 0.0
    %v384 = vld [vmem:[%s3] sm:$0x1]
    %s385 = sld [smem:[#allocation2]]
    %v386 = vstv %s385
    %387 = vmatprep.subr.mxu0 %v353
    %388 = vmatpush1.msra.mxu0 %v352
    %389 = vmatprep.subr.mxu0 %v355
    %390 = vmatpush1.msra.mxu0 %v354
    %391 = vmatprep.subr.mxu0 %v357
    %392 = vmatpush1.msra.mxu0 %v356
    %393 = vmatprep.subr.mxu0 %v359
    %394 = vmatpush1.msra.mxu0 %v358
    %395 = vmatprep.subr.mxu0 %v361
    %396 = vmatpush1.msra.mxu0 %v360
    %397 = vmatprep.subr.mxu0 %v363
    %398 = vmatpush1.msra.mxu0 %v362
    %399 = vmatprep.subr.mxu0 %v365
    %400 = vmatpush1.msra.mxu0 %v364
    %401 = vmatprep.subr.mxu0 %v367
    %402 = vmatpush1.msra.mxu0 %v366
    %403 = vmatprep.subr.mxu0 %v369
    %404 = vmatpush1.msra.mxu0 %v368
    %405 = vmatprep.subr.mxu0 %v371
    %406 = vmatpush1.msra.mxu0 %v370
    %407 = vmatprep.subr.mxu0 %v373
    %408 = vmatpush1.msra.mxu0 %v372
    %409 = vmatprep.subr.mxu0 %v375
    %410 = vmatpush1.msra.mxu0 %v374
    %411 = vmatprep.subr.mxu0 %v377
    %412 = vmatpush1.msra.mxu0 %v376
    %413 = vmatprep.subr.mxu0 %v379
    %414 = vmatpush1.msra.mxu0 %v378
    %415 = vmatprep.subr.mxu0 %v381
    %416 = vmatpush1.msra.mxu0 %v380
    %417 = vmatprep.subr.mxu0 %v383
    %418 = vmatpush1.msra.mxu0 %v382
    %419 = vmatprep.subr.mxu0 0.0
    %420 = vmatpush1.msra.mxu0 0.0
    %421 = vmatprep.subr.mxu0 0.0
    %422 = vmatpush1.msra.mxu0 0.0
    %423 = vmatprep.subr.mxu0 0.0
    %424 = vmatpush1.msra.mxu0 0.0
    %425 = vmatprep.subr.mxu0 0.0
    %426 = vmatpush1.msra.mxu0 0.0
    %427 = vmatprep.subr.mxu0 0.0
    %428 = vmatpush1.msra.mxu0 0.0
    %429 = vmatprep.subr.mxu0 0.0
    %430 = vmatpush1.msra.mxu0 0.0
    %431 = vmatprep.subr.mxu0 0.0
    %432 = vmatpush1.msra.mxu0 0.0
    %433 = vmatprep.subr.mxu0 0.0
    %434 = vmatpush1.msra.mxu0 0.0
    %435 = vmatprep.subr.mxu0 0.0
    %436 = vmatpush1.msra.mxu0 0.0
    %437 = vmatprep.subr.mxu0 0.0
    %438 = vmatpush1.msra.mxu0 0.0
    %439 = vmatprep.subr.mxu0 0.0
    %440 = vmatpush1.msra.mxu0 0.0
    %441 = vmatprep.subr.mxu0 0.0
    %442 = vmatpush1.msra.mxu0 0.0
    %443 = vmatprep.subr.mxu0 0.0
    %444 = vmatpush1.msra.mxu0 0.0
    %445 = vmatprep.subr.mxu0 0.0
    %446 = vmatpush1.msra.mxu0 0.0
    %447 = vmatprep.subr.mxu0 0.0
    %448 = vmatpush1.msra.mxu0 0.0
    %449 = vmatprep.subr.mxu0 0.0
    %450 = vmatpush1.msra.mxu0 0.0
    %451 = vmatprep.mubr.f32.mxu0 0.0
    %452 = vmatmul.mubr.f32.gmra.mrb[0].mxu0 %v384
    %v453 = vpop.f32.mrb[0].mxu0
    %v454 = vadd.f32 %v386, %v453
    %v455 = vpop.f32.mrb[0].mxu0
    %v456 = vadd.f32 %v386, %v455
    %457 = vdwg.mxu0
    %v460 = vcombine.low %v454, %v456
    %v462 = vunpack.c.l.s4 1966171168
    %v463 = vunpack.c.0.s8 %v462
    %v464 = vlaneseq
    %v465 = vshrl.u32 %v464, 7
    %v466 = vsub.s32 %v463, %v465
    %v467 = vrot.slane %v460, %v466
    %v469 = vunpack.c.l.s4 1966171168
    %v470 = vunpack.c.0.s8 %v469
    %v471 = vlaneseq
    %v472 = vshrl.u32 %v471, 7
    %v473 = vsub.s32 %v470, %v472
    %v474 = vrot.slane %v467, %v473
    %v476 = vlaneseq
    %vm477 = vcmp.ge.s32.totalorder %v476, 0
    %vm478 = vcmp.lt.s32.totalorder %v476, 256
    %vm479 = vmand %vm477, %vm478
    %480 = vst.msk [vmem:[#allocation3] sm:$0x3] %vm479, %v474
    // Predicated region
    $region22: #{tpu_custom_call.1} parent=1 // pred_check
      _
    $region23: #{tpu_custom_call.1} parent=1 // pred_check_branch
      %482 = sbr.rel (0) target = $region25
    $region24: #{tpu_custom_call.1} parent=1 // pred_region
      %s484 = ssub.s32 32, 32
      %485 = vsyncadd [#allocation4], %s484
      %s487 = sshll.u32 [#allocation3], 4
      %s488 = int_to_ptr.vmem [resolvable:$true] %s487
      %490 = dma.vmem_to_hbm [thread:$0]  %s488, 32, %s5, [#allocation4]
    $region25: #{tpu_custom_call.1} parent=1 // pred_fallthru
      _
    // Predicated region
    $region26: #{tpu_custom_call.1} parent=1 // pred_check
      _
    $region27: #{tpu_custom_call.1} parent=1 // pred_check_branch
      %492 = sbr.rel (0) target = $region29
    $region28: #{tpu_custom_call.1} parent=1 // pred_region
      %493 = dma.done [#allocation4], 32
    $region29: #{tpu_custom_call.1} parent=1 // pred_fallthru
      _
    %494 = vsyncpa [#allocation4], 1

</llo_original>
